<compile_context>
chip_gen: v7x
topology: tpu7x:2x2x1
jax: 0.10.0
libtpu: 0.0.40
codegen_flags: <defaults>
</compile_context>

<pallas_src>
import jax
import jax.numpy as jnp
from jax.experimental import pallas as pl
from jax.experimental.pallas import tpu as pltpu

# Network architecture (from CustomNetwork.__init__):
#   feature_dim -> 256 -ReLU-> 256 -ReLU-> 128 -ReLU-> 64 -ReLU-> latent_dim -Tanh
HIDDEN_DIMS = (256, 256, 128, 64)
LANE = 128               # TPU lane width; final layer output padded to a multiple of this
MAX_BATCH_TILE = 256     # MXU-friendly, comfortably inside VMEM on every chip


def _layer_dims(feature_dim, latent_dim):
    return [feature_dim, *HIDDEN_DIMS, latent_dim]


# ----------------------------------------------------------------------------
# Kernel: one (head, batch-tile) grid step of the fused actor/critic MLP.
# ----------------------------------------------------------------------------
def _fused_mlp_kernel(x_ref,
                      w1, b1, w2, b2, w3, b3, w4, b4, w5, b5,
                      out_ref):
    def dense(h, w_ref, b_ref):
        # bf16 operands on the MXU, f32 accumulation; bias add in f32 on the VPU.
        return jnp.dot(h.astype(jnp.bfloat16), w_ref[0],
                       preferred_element_type=jnp.float32) + b_ref[0]

    h = x_ref[...]                                   # (TB, F) f32
    h = jnp.maximum(dense(h, w1, b1), 0.0)
    h = jnp.maximum(dense(h, w2, b2), 0.0)
    h = jnp.maximum(dense(h, w3, b3), 0.0)
    h = jnp.maximum(dense(h, w4, b4), 0.0)
    out_ref[0] = jnp.tanh(dense(h, w5, b5)).astype(out_ref.dtype)   # (TB, OUT_PAD)


# ----------------------------------------------------------------------------
# Wrapper: grid = (2 heads, batch tiles); weights resident per head, x/out
# pipelined by BlockSpec double-buffering.
# ----------------------------------------------------------------------------
def fused_mlp_forward(x, stacked_params, *, out_pad):
    B, F = x.shape
    TB = B if B <= MAX_BATCH_TILE else MAX_BATCH_TILE   # full-extent or multiple of 8
    n_tiles = pl.cdiv(B, TB)

    flat_args = [x]
    in_specs = [pl.BlockSpec((TB, F), lambda h, i: (i, 0))]

    flops = 0
    bytes_accessed = 2 * x.size * x.dtype.itemsize      # x streamed once per head
    for w, b in stacked_params:                          # w: (2, k, n) bf16, b: (2, 1, n) f32
        _, k, n = w.shape
        flat_args += [w, b]
        in_specs += [
            pl.BlockSpec((1, k, n), lambda h, i: (h, 0, 0)),
            pl.BlockSpec((1, 1, n), lambda h, i: (h, 0, 0)),
        ]
        flops += 2 * 2 * B * k * n                       # 2 heads, 2 flops per MAC
        bytes_accessed += w.size * w.dtype.itemsize + b.size * b.dtype.itemsize
    bytes_accessed += 2 * B * out_pad * 4                # output writeback

    out_shape = jax.ShapeDtypeStruct((2, B, out_pad), jnp.float32)
    return pl.pallas_call(
        _fused_mlp_kernel,
        grid=(2, n_tiles),
        in_specs=in_specs,
        out_specs=pl.BlockSpec((1, TB, out_pad), lambda h, i: (h, i, 0)),
        out_shape=out_shape,
        compiler_params=pltpu.CompilerParams(
            dimension_semantics=("parallel", "parallel")),
        cost_estimate=pl.CostEstimate(
            flops=flops,
            transcendentals=2 * B * out_pad,
            bytes_accessed=bytes_accessed),
    )(*flat_args)


# ----------------------------------------------------------------------------
# Parameter construction.
# ----------------------------------------------------------------------------
def init_mlp_params(key, feature_dim, latent_dim):
    """Deterministic synthetic init (PyTorch-Linear-like uniform fan-in scaling)."""
    dims = _layer_dims(feature_dim, latent_dim)
    params = []
    for i in range(len(dims) - 1):
        fan_in, fan_out = dims[i], dims[i + 1]
        key, kw, kb = jax.random.split(key, 3)
        bound = 1.0 / jnp.sqrt(fan_in)
        w = jax.random.uniform(kw, (fan_in, fan_out), jnp.float32, -bound, bound)
        b = jax.random.uniform(kb, (fan_out,), jnp.float32, -bound, bound)
        params.append((w, b))
    return params, key


def _pad_cols(a, n):
    pad = n - a.shape[-1]
    if pad == 0:
        return a
    widths = [(0, 0)] * (a.ndim - 1) + [(0, pad)]
    return jnp.pad(a, widths)


def _stack_heads(policy_params, value_params, out_pad):
    """Stack actor/critic params on a leading head axis.

    Weights -> bf16 (MXU operands), biases -> (2, 1, out) f32; final layer
    zero-padded to `out_pad` output lanes for lane-dense stores.  Done ONCE
    at init, so the per-forward path does no layout work.
    """
    stacked = []
    n_layers = len(policy_params)
    for li, ((wp, bp), (wv, bv)) in enumerate(zip(policy_params, value_params)):
        if li == n_layers - 1:
            wp, wv = _pad_cols(wp, out_pad), _pad_cols(wv, out_pad)
            bp, bv = _pad_cols(bp, out_pad), _pad_cols(bv, out_pad)
        w = jnp.stack([wp, wv]).astype(jnp.bfloat16)                   # (2, in, out)
        b = jnp.stack([bp, bv]).reshape(2, 1, -1).astype(jnp.float32)  # (2, 1, out)
        stacked.append((w, b))
    return stacked


class CustomNetworkPallas:
    """JAX/Pallas equivalent of the PyTorch CustomNetwork (fused actor+critic MLPs)."""

    def __init__(self, feature_dim, last_layer_dim_pi=32, last_layer_dim_vf=32,
                 key=None):
        if key is None:
            key = jax.random.PRNGKey(0)
        self.latent_dim_pi = last_layer_dim_pi
        self.latent_dim_vf = last_layer_dim_vf
        self.policy_params, key = init_mlp_params(key, feature_dim, last_layer_dim_pi)
        self.value_params, _ = init_mlp_params(key, feature_dim, last_layer_dim_vf)
        max_latent = max(last_layer_dim_pi, last_layer_dim_vf)
        self.out_pad = max(LANE, -(-max_latent // LANE) * LANE)
        # Kernel-side params: stacked / bf16 / padded, prepared once.
        self.kernel_params = _stack_heads(self.policy_params, self.value_params,
                                          self.out_pad)

    def forward(self, features):
        features = jnp.asarray(features, jnp.float32)
        out = fused_mlp_forward(features, self.kernel_params, out_pad=self.out_pad)
        latent_pi = out[0, :, :self.latent_dim_pi]
        latent_vf = out[1, :, :self.latent_dim_vf]
        return latent_pi, latent_vf

    def forward_actor(self, features):
        return self.forward(features)[0]

    def forward_critic(self, features):
        return self.forward(features)[1]


# ----------------------------------------------------------------------------
# Pure-JAX reference mirroring the kernel numerics (bf16 matmul, f32 accum).
# ----------------------------------------------------------------------------
def _reference_mlp(x, params):
    h = x
    for i, (w, b) in enumerate(params):
        y = jnp.dot(h.astype(jnp.bfloat16), w.astype(jnp.bfloat16),
                    preferred_element_type=jnp.float32) + b
        h = jnp.tanh(y) if i == len(params) - 1 else jnp.maximum(y, 0.0)
    return h


if __name__ == "__main__":
    key = jax.random.PRNGKey(0)
    batch, feature_dim = 8, 32

    kx, kparams = jax.random.split(key)
    features = jax.random.normal(kx, (batch, feature_dim), jnp.float32)

    net = CustomNetworkPallas(feature_dim, last_layer_dim_pi=32,
                              last_layer_dim_vf=32, key=kparams)

    latent_pi, latent_vf = net.forward(features)
    jax.block_until_ready((latent_pi, latent_vf))

    # Sanity check vs pure-JAX reference (same bf16-weight numerics).
    ref_pi = _reference_mlp(features, net.policy_params)
    ref_vf = _reference_mlp(features, net.value_params)
    assert latent_pi.shape == (batch, 32) and latent_vf.shape == (batch, 32)
    assert jnp.allclose(latent_pi, ref_pi, atol=1e-2, rtol=1e-2)
    assert jnp.allclose(latent_vf, ref_vf, atol=1e-2, rtol=1e-2)

    print("KERNEL_OK")
</pallas_src>

<mosaic_0001>
module attributes {stable_mosaic.version = 11 : i64} {
  func.func @_fused_mlp_kernel(%arg0: i32, %arg1: i32, %arg2: memref<8x32xf32, #tpu.memory_space<vmem>>, %arg3: memref<1x32x256xbf16, #tpu.memory_space<vmem>>, %arg4: memref<1x1x256xf32, #tpu.memory_space<vmem>>, %arg5: memref<1x256x256xbf16, #tpu.memory_space<vmem>>, %arg6: memref<1x1x256xf32, #tpu.memory_space<vmem>>, %arg7: memref<1x256x128xbf16, #tpu.memory_space<vmem>>, %arg8: memref<1x1x128xf32, #tpu.memory_space<vmem>>, %arg9: memref<1x128x64xbf16, #tpu.memory_space<vmem>>, %arg10: memref<1x1x64xf32, #tpu.memory_space<vmem>>, %arg11: memref<1x64x128xbf16, #tpu.memory_space<vmem>>, %arg12: memref<1x1x128xf32, #tpu.memory_space<vmem>>, %arg13: memref<1x8x128xf32, #tpu.memory_space<vmem>>) attributes {dimension_semantics = [#tpu.dimension_semantics<parallel>, #tpu.dimension_semantics<parallel>], iteration_bounds = array<i64: 2, 1>, scalar_prefetch = 0 : i64, scratch_operands = 0 : i64, tpu.core_type = #tpu.core_type<tc>, window_params = [{transform_indices = @transform_0, window_bounds = array<i64: 8, 32>}, {transform_indices = @transform_1, window_bounds = array<i64: 1, 32, 256>}, {transform_indices = @transform_2, window_bounds = array<i64: 1, 1, 256>}, {transform_indices = @transform_3, window_bounds = array<i64: 1, 256, 256>}, {transform_indices = @transform_4, window_bounds = array<i64: 1, 1, 256>}, {transform_indices = @transform_5, window_bounds = array<i64: 1, 256, 128>}, {transform_indices = @transform_6, window_bounds = array<i64: 1, 1, 128>}, {transform_indices = @transform_7, window_bounds = array<i64: 1, 128, 64>}, {transform_indices = @transform_8, window_bounds = array<i64: 1, 1, 64>}, {transform_indices = @transform_9, window_bounds = array<i64: 1, 64, 128>}, {transform_indices = @transform_10, window_bounds = array<i64: 1, 1, 128>}, {transform_indices = @transform_11, window_bounds = array<i64: 1, 8, 128>}]} {
    %c0 = arith.constant 0 : index
    %c0_0 = arith.constant 0 : index
    %0 = vector.load %arg2[%c0, %c0_0] : memref<8x32xf32, #tpu.memory_space<vmem>>, vector<8x32xf32>
    %1 = arith.truncf %0 : vector<8x32xf32> to vector<8x32xbf16>
    %c0_1 = arith.constant 0 : index
    %c0_2 = arith.constant 0 : index
    %c0_3 = arith.constant 0 : index
    %2 = vector.load %arg3[%c0_1, %c0_2, %c0_3] : memref<1x32x256xbf16, #tpu.memory_space<vmem>>, vector<1x32x256xbf16>
    %3 = vector.shape_cast %2 : vector<1x32x256xbf16> to vector<32x256xbf16>
    %cst = arith.constant dense<0.000000e+00> : vector<8x256xf32>
    %4 = tpu.matmul %1, %3, %cst {dimension_numbers = #tpu.dot_dimension_numbers<[1], [0], [0], [1], [0, 0, 1, 1], [], []>} : vector<8x32xbf16>, vector<32x256xbf16>, vector<8x256xf32> -> vector<8x256xf32>
    %c0_4 = arith.constant 0 : index
    %c0_5 = arith.constant 0 : index
    %c0_6 = arith.constant 0 : index
    %5 = vector.load %arg4[%c0_4, %c0_5, %c0_6] : memref<1x1x256xf32, #tpu.memory_space<vmem>>, vector<1x1x256xf32>
    %6 = vector.shape_cast %5 : vector<1x1x256xf32> to vector<1x256xf32>
    %7 = vector.broadcast %6 : vector<1x256xf32> to vector<8x256xf32>
    %8 = arith.addf %4, %7 : vector<8x256xf32>
    %cst_7 = arith.constant 0.000000e+00 : f32
    %9 = vector.broadcast %cst_7 : f32 to vector<8x256xf32>
    %10 = arith.maximumf %8, %9 : vector<8x256xf32>
    %11 = arith.truncf %10 : vector<8x256xf32> to vector<8x256xbf16>
    %c0_8 = arith.constant 0 : index
    %c0_9 = arith.constant 0 : index
    %c0_10 = arith.constant 0 : index
    %12 = vector.load %arg5[%c0_8, %c0_9, %c0_10] : memref<1x256x256xbf16, #tpu.memory_space<vmem>>, vector<1x256x256xbf16>
    %13 = vector.shape_cast %12 : vector<1x256x256xbf16> to vector<256x256xbf16>
    %cst_11 = arith.constant dense<0.000000e+00> : vector<8x256xf32>
    %14 = tpu.matmul %11, %13, %cst_11 {dimension_numbers = #tpu.dot_dimension_numbers<[1], [0], [0], [1], [0, 0, 1, 1], [], []>} : vector<8x256xbf16>, vector<256x256xbf16>, vector<8x256xf32> -> vector<8x256xf32>
    %c0_12 = arith.constant 0 : index
    %c0_13 = arith.constant 0 : index
    %c0_14 = arith.constant 0 : index
    %15 = vector.load %arg6[%c0_12, %c0_13, %c0_14] : memref<1x1x256xf32, #tpu.memory_space<vmem>>, vector<1x1x256xf32>
    %16 = vector.shape_cast %15 : vector<1x1x256xf32> to vector<1x256xf32>
    %17 = vector.broadcast %16 : vector<1x256xf32> to vector<8x256xf32>
    %18 = arith.addf %14, %17 : vector<8x256xf32>
    %cst_15 = arith.constant 0.000000e+00 : f32
    %19 = vector.broadcast %cst_15 : f32 to vector<8x256xf32>
    %20 = arith.maximumf %18, %19 : vector<8x256xf32>
    %21 = arith.truncf %20 : vector<8x256xf32> to vector<8x256xbf16>
    %c0_16 = arith.constant 0 : index
    %c0_17 = arith.constant 0 : index
    %c0_18 = arith.constant 0 : index
    %22 = vector.load %arg7[%c0_16, %c0_17, %c0_18] : memref<1x256x128xbf16, #tpu.memory_space<vmem>>, vector<1x256x128xbf16>
    %23 = vector.shape_cast %22 : vector<1x256x128xbf16> to vector<256x128xbf16>
    %cst_19 = arith.constant dense<0.000000e+00> : vector<8x128xf32>
    %24 = tpu.matmul %21, %23, %cst_19 {dimension_numbers = #tpu.dot_dimension_numbers<[1], [0], [0], [1], [0, 0, 1, 1], [], []>} : vector<8x256xbf16>, vector<256x128xbf16>, vector<8x128xf32> -> vector<8x128xf32>
    %c0_20 = arith.constant 0 : index
    %c0_21 = arith.constant 0 : index
    %c0_22 = arith.constant 0 : index
    %25 = vector.load %arg8[%c0_20, %c0_21, %c0_22] : memref<1x1x128xf32, #tpu.memory_space<vmem>>, vector<1x1x128xf32>
    %26 = vector.shape_cast %25 : vector<1x1x128xf32> to vector<1x128xf32>
    %27 = vector.broadcast %26 : vector<1x128xf32> to vector<8x128xf32>
    %28 = arith.addf %24, %27 : vector<8x128xf32>
    %cst_23 = arith.constant 0.000000e+00 : f32
    %29 = vector.broadcast %cst_23 : f32 to vector<8x128xf32>
    %30 = arith.maximumf %28, %29 : vector<8x128xf32>
    %31 = arith.truncf %30 : vector<8x128xf32> to vector<8x128xbf16>
    %c0_24 = arith.constant 0 : index
    %c0_25 = arith.constant 0 : index
    %c0_26 = arith.constant 0 : index
    %32 = vector.load %arg9[%c0_24, %c0_25, %c0_26] : memref<1x128x64xbf16, #tpu.memory_space<vmem>>, vector<1x128x64xbf16>
    %33 = vector.shape_cast %32 : vector<1x128x64xbf16> to vector<128x64xbf16>
    %cst_27 = arith.constant dense<0.000000e+00> : vector<8x64xf32>
    %34 = tpu.matmul %31, %33, %cst_27 {dimension_numbers = #tpu.dot_dimension_numbers<[1], [0], [0], [1], [0, 0, 1, 1], [], []>} : vector<8x128xbf16>, vector<128x64xbf16>, vector<8x64xf32> -> vector<8x64xf32>
    %c0_28 = arith.constant 0 : index
    %c0_29 = arith.constant 0 : index
    %c0_30 = arith.constant 0 : index
    %35 = vector.load %arg10[%c0_28, %c0_29, %c0_30] : memref<1x1x64xf32, #tpu.memory_space<vmem>>, vector<1x1x64xf32>
    %36 = vector.shape_cast %35 : vector<1x1x64xf32> to vector<1x64xf32>
    %37 = vector.broadcast %36 : vector<1x64xf32> to vector<8x64xf32>
    %38 = arith.addf %34, %37 : vector<8x64xf32>
    %cst_31 = arith.constant 0.000000e+00 : f32
    %39 = vector.broadcast %cst_31 : f32 to vector<8x64xf32>
    %40 = arith.maximumf %38, %39 : vector<8x64xf32>
    %41 = arith.truncf %40 : vector<8x64xf32> to vector<8x64xbf16>
    %c0_32 = arith.constant 0 : index
    %c0_33 = arith.constant 0 : index
    %c0_34 = arith.constant 0 : index
    %42 = vector.load %arg11[%c0_32, %c0_33, %c0_34] : memref<1x64x128xbf16, #tpu.memory_space<vmem>>, vector<1x64x128xbf16>
    %43 = vector.shape_cast %42 : vector<1x64x128xbf16> to vector<64x128xbf16>
    %cst_35 = arith.constant dense<0.000000e+00> : vector<8x128xf32>
    %44 = tpu.matmul %41, %43, %cst_35 {dimension_numbers = #tpu.dot_dimension_numbers<[1], [0], [0], [1], [0, 0, 1, 1], [], []>} : vector<8x64xbf16>, vector<64x128xbf16>, vector<8x128xf32> -> vector<8x128xf32>
    %c0_36 = arith.constant 0 : index
    %c0_37 = arith.constant 0 : index
    %c0_38 = arith.constant 0 : index
    %45 = vector.load %arg12[%c0_36, %c0_37, %c0_38] : memref<1x1x128xf32, #tpu.memory_space<vmem>>, vector<1x1x128xf32>
    %46 = vector.shape_cast %45 : vector<1x1x128xf32> to vector<1x128xf32>
    %47 = vector.broadcast %46 : vector<1x128xf32> to vector<8x128xf32>
    %48 = arith.addf %44, %47 : vector<8x128xf32>
    %49 = math.tanh %48 : vector<8x128xf32>
    %c0_39 = arith.constant 0 : index
    %c0_40 = arith.constant 0 : index
    %c0_41 = arith.constant 0 : index
    %50 = vector.load %arg13[%c0_39, %c0_40, %c0_41] : memref<1x8x128xf32, #tpu.memory_space<vmem>>, vector<1x8x128xf32>
    %51 = vector.shape_cast %50 : vector<1x8x128xf32> to vector<8x128xf32>
    %52 = vector.shape_cast %49 : vector<8x128xf32> to vector<1x8x128xf32>
    tpu.vector_store %arg13[%c0_39, %c0_40, %c0_41], %52 {strides = array<i32>} : memref<1x8x128xf32, #tpu.memory_space<vmem>>, vector<1x8x128xf32>,
    return
  }
  func.func @transform_0(%arg0: i32, %arg1: i32) -> (i32, i32) {
    %c0_i32 = arith.constant 0 : i32
    %c0_i32_0 = arith.constant 0 : i32
    return %arg1, %c0_i32 : i32, i32
  }
  func.func @transform_1(%arg0: i32, %arg1: i32) -> (i32, i32, i32) {
    %c0_i32 = arith.constant 0 : i32
    %c0_i32_0 = arith.constant 0 : i32
    %c0_i32_1 = arith.constant 0 : i32
    return %arg0, %c0_i32, %c0_i32_0 : i32, i32, i32
  }
  func.func @transform_2(%arg0: i32, %arg1: i32) -> (i32, i32, i32) {
    %c0_i32 = arith.constant 0 : i32
    %c0_i32_0 = arith.constant 0 : i32
    %c0_i32_1 = arith.constant 0 : i32
    return %arg0, %c0_i32, %c0_i32_0 : i32, i32, i32
  }
  func.func @transform_3(%arg0: i32, %arg1: i32) -> (i32, i32, i32) {
    %c0_i32 = arith.constant 0 : i32
    %c0_i32_0 = arith.constant 0 : i32
    %c0_i32_1 = arith.constant 0 : i32
    return %arg0, %c0_i32, %c0_i32_0 : i32, i32, i32
  }
  func.func @transform_4(%arg0: i32, %arg1: i32) -> (i32, i32, i32) {
    %c0_i32 = arith.constant 0 : i32
    %c0_i32_0 = arith.constant 0 : i32
    %c0_i32_1 = arith.constant 0 : i32
    return %arg0, %c0_i32, %c0_i32_0 : i32, i32, i32
  }
  func.func @transform_5(%arg0: i32, %arg1: i32) -> (i32, i32, i32) {
    %c0_i32 = arith.constant 0 : i32
    %c0_i32_0 = arith.constant 0 : i32
    %c0_i32_1 = arith.constant 0 : i32
    return %arg0, %c0_i32, %c0_i32_0 : i32, i32, i32
  }
  func.func @transform_6(%arg0: i32, %arg1: i32) -> (i32, i32, i32) {
    %c0_i32 = arith.constant 0 : i32
    %c0_i32_0 = arith.constant 0 : i32
    %c0_i32_1 = arith.constant 0 : i32
    return %arg0, %c0_i32, %c0_i32_0 : i32, i32, i32
  }
  func.func @transform_7(%arg0: i32, %arg1: i32) -> (i32, i32, i32) {
    %c0_i32 = arith.constant 0 : i32
    %c0_i32_0 = arith.constant 0 : i32
    %c0_i32_1 = arith.constant 0 : i32
    return %arg0, %c0_i32, %c0_i32_0 : i32, i32, i32
  }
  func.func @transform_8(%arg0: i32, %arg1: i32) -> (i32, i32, i32) {
    %c0_i32 = arith.constant 0 : i32
    %c0_i32_0 = arith.constant 0 : i32
    %c0_i32_1 = arith.constant 0 : i32
    return %arg0, %c0_i32, %c0_i32_0 : i32, i32, i32
  }
  func.func @transform_9(%arg0: i32, %arg1: i32) -> (i32, i32, i32) {
    %c0_i32 = arith.constant 0 : i32
    %c0_i32_0 = arith.constant 0 : i32
    %c0_i32_1 = arith.constant 0 : i32
    return %arg0, %c0_i32, %c0_i32_0 : i32, i32, i32
  }
  func.func @transform_10(%arg0: i32, %arg1: i32) -> (i32, i32, i32) {
    %c0_i32 = arith.constant 0 : i32
    %c0_i32_0 = arith.constant 0 : i32
    %c0_i32_1 = arith.constant 0 : i32
    return %arg0, %c0_i32, %c0_i32_0 : i32, i32, i32
  }
  func.func @transform_11(%arg0: i32, %arg1: i32) -> (i32, i32, i32) {
    %c0_i32 = arith.constant 0 : i32
    %c0_i32_0 = arith.constant 0 : i32
    return %arg0, %arg1, %c0_i32 : i32, i32, i32
  }
}

</mosaic_0001>

<llo_original>
// kernel: tpu_custom_call.1
$region0: #{tpu_custom_call.1}
  #allocation0 [shape = 'u32[]', space=smem, size = 0x4, offset = 0x4, fixed_abs, tag = 'smem constant byte address 0x4 - core index']
  #allocation1 [shape = 'u32[144,128]{1,0:T(1,128)}', space=vmem, size = 0x12000, scoped, tag = 'internal scratch']
  %s0 = inlined_call_operand.vmem [shape: f32[8,32], index: 0, kind: input, shape index: {}]
  %s1 = inlined_call_operand.vmem [shape: bf16[2,32,256], index: 1, kind: input, shape index: {}]
  %s2 = inlined_call_operand.vmem [shape: f32[2,1,256], index: 2, kind: input, shape index: {}]
  %s3 = inlined_call_operand.hbm [shape: bf16[2,256,256], index: 3, kind: input, shape index: {}]
  %s4 = inlined_call_operand.vmem [shape: f32[2,1,256], index: 4, kind: input, shape index: {}]
  %s5 = inlined_call_operand.hbm [shape: bf16[2,256,128], index: 5, kind: input, shape index: {}]
  %s6 = inlined_call_operand.vmem [shape: f32[2,1,128], index: 6, kind: input, shape index: {}]
  %s7 = inlined_call_operand.vmem [shape: bf16[2,128,64], index: 7, kind: input, shape index: {}]
  %s8 = inlined_call_operand.vmem [shape: f32[2,1,64], index: 8, kind: input, shape index: {}]
  %s9 = inlined_call_operand.vmem [shape: bf16[2,64,128], index: 9, kind: input, shape index: {}]
  %s10 = inlined_call_operand.vmem [shape: f32[2,1,128], index: 10, kind: input, shape index: {}]
  %s11 = inlined_call_operand.hbm [shape: f32[2,8,128], index: 11, kind: output, shape index: {}]
  %s12 = sld [smem:[#allocation0]]
  $region85: #{tpu_custom_call.1} parent=0
    _
  %s14 = ssub.s32 1, %s12
  %s15 = scalar_select 0, %s14, %s12
  $region1: #{tpu_custom_call.1} parent=0
    #allocation2 [shape = 'u8[262144]{0}', space=vmem, size = 0x40000, scoped, tag = 'input window, operand 3']
    #allocation3 [shape = 's32[2]{0}', space=sflag, size = 0x8, scoped, tag = 'scoped memory for tpu_custom_call.1']
    #allocation4 [shape = 's32[2]{0}', space=sflag, size = 0x8, scoped, tag = 'scoped memory for tpu_custom_call.1']
    #allocation5 [shape = 'u8[131072]{0}', space=vmem, size = 0x20000, scoped, tag = 'input window, operand 5']
    #allocation6 [shape = 's32[2]{0}', space=sflag, size = 0x8, scoped, tag = 'scoped memory for tpu_custom_call.1']
    #allocation7 [shape = 'u8[8192]{0}', space=vmem, size = 0x2000, scoped, tag = 'output window, operand 0']
    %16 = vsyncpa [#allocation3], 0
    %s17 = scalar_lea.sflag [#allocation3], 1
    %18 = vsyncpa %s17, 0
    %19 = vsyncpa [#allocation6], 0
    %s20 = scalar_lea.sflag [#allocation6], 1
    %21 = vsyncpa %s20, 0
    %22 = vsyncpa [#allocation4], 0
    %s23 = scalar_lea.sflag [#allocation4], 1
    %24 = vsyncpa %s23, 0
    loop: start=0, step=1, limit=4
    $region2: #{tpu_custom_call.1} parent=1 // loop_pre_header
      _
    $region3: #{tpu_custom_call.1} parent=1 // loop_header
      %s26 = sphi 0, %s30
      %p27 = scmp.ge.s32.totalorder %s26, 4
      %s33 = sphi 0, %s45
      %s34 = sphi 0, %s41
      %s35 = sphi 0, %s33
      %s36 = sphi 0, %s34
      %s37 = sphi 0, %s35
      %s38 = sphi 0, %s36
      %s48 = sphi 0, %s50
      %s51 = sphi 0, %s48
      %s52 = sphi 0, %s51
      %s68 = sphi 0, %s52
      %s74 = sphi 0, %s76
      %s77 = sphi 0, %s74
      %s78 = sphi 0, %s77
      %s94 = sphi 0, %s78
      %s100 = sphi 0, %s102
      %s103 = sphi 0, %s100
      %s104 = sphi 0, %s103
      %s120 = sphi 0, %s104
      %s126 = sphi 0, %s128
      %s129 = sphi 0, %s126
      %s130 = sphi 0, %s129
      %s146 = sphi 0, %s130
      %s152 = sphi 0, %s154
      %s155 = sphi 0, %s152
      %s156 = sphi 0, %s155
      %s172 = sphi 0, %s156
      %s178 = sphi 0, %s180
      %s181 = sphi 0, %s178
      %s182 = sphi 0, %s181
      %s198 = sphi 0, %s182
      %s204 = sphi 0, %s206
      %s207 = sphi 0, %s204
      %s208 = sphi 0, %s207
      %s224 = sphi 0, %s208
      %s230 = sphi 0, %s232
      %s233 = sphi 0, %s230
      %s234 = sphi 0, %s233
      %s250 = sphi 0, %s234
      %s256 = sphi 0, %s258
      %s259 = sphi 0, %s256
      %s260 = sphi 0, %s259
      %s276 = sphi 0, %s260
      %s282 = sphi 0, %s284
      %s285 = sphi 0, %s282
      %s286 = sphi 0, %s285
      %s302 = sphi 0, %s286
      %s308 = sphi 0, %s310
      %s311 = sphi 0, %s308
      %s312 = sphi 0, %s311
      %s328 = sphi 0, %s312
      %s336 = sphi 0, %s338
      %s339 = sphi 0, %s336
      %s340 = sphi 0, %s339
      %s356 = sphi 0, %s340
    $region4: #{tpu_custom_call.1} parent=1 // loop_header_branch
      %29 = sbr.rel (%p27) target = $region8
    $region5: #{tpu_custom_call.1} parent=1 // loop_body
      %s31 = ssub.s32 %s26, 1
      %s32 = ssub.s32 %s26, 2
      %s39 = sadd.s32 1, %s34
      %p40 = scmp.ge.s32.totalorder %s39, 1
      %s41 = scalar_select %p40, 0, %s39
      %s42 = sadd.s32 1, %s33
      %s43 = scalar_select %p40, %s42, %s33
      %p44 = scmp.ge.s32.totalorder %s43, 2
      %s45 = scalar_select %p44, 0, %s43
      %s46 = ssub.s32 %s34, %s41
      %p47 = scmp.eq.s32.totalorder %s46, 0
      %s49 = sadd.s32 %s48, 1
      %s50 = scalar_select %p47, %s48, %s49
      %p53 = pneg %p47
      %p54 = scmp.eq.s32.totalorder %s26, 1
      %p55 = por %p53, %p54
      %p56 = scmp.ne.s32.totalorder %s48, %s51
      %p57 = scmp.eq.s32.totalorder %s26, 0
      %p58 = por %p56, %p57
      %p59 = scmp.ne.s32.totalorder %s48, %s51
      %p60 = scmp.eq.s32.totalorder %s31, 1
      %p61 = por %p59, %p60
      %p62 = scmp.ne.s32.totalorder %s51, %s52
      %p63 = scmp.eq.s32.totalorder %s31, 0
      %p64 = por %p62, %p63
      %p65 = scmp.ne.s32.totalorder %s51, %s52
      %p66 = scmp.eq.s32.totalorder %s32, 1
      %p67 = por %p65, %p66
      %p69 = scmp.ne.s32.totalorder %s52, %s68
      %p70 = scmp.eq.s32.totalorder %s32, 0
      %p71 = por %p69, %p70
      %s72 = ssub.s32 %s33, %s45
      %p73 = scmp.eq.s32.totalorder %s72, 0
      %s75 = sadd.s32 %s74, 1
      %s76 = scalar_select %p73, %s74, %s75
      %p79 = pneg %p73
      %p80 = scmp.eq.s32.totalorder %s26, 1
      %p81 = por %p79, %p80
      %p82 = scmp.ne.s32.totalorder %s74, %s77
      %p83 = scmp.eq.s32.totalorder %s26, 0
      %p84 = por %p82, %p83
      %p85 = scmp.ne.s32.totalorder %s74, %s77
      %p86 = scmp.eq.s32.totalorder %s31, 1
      %p87 = por %p85, %p86
      %p88 = scmp.ne.s32.totalorder %s77, %s78
      %p89 = scmp.eq.s32.totalorder %s31, 0
      %p90 = por %p88, %p89
      %p91 = scmp.ne.s32.totalorder %s77, %s78
      %p92 = scmp.eq.s32.totalorder %s32, 1
      %p93 = por %p91, %p92
      %p95 = scmp.ne.s32.totalorder %s78, %s94
      %p96 = scmp.eq.s32.totalorder %s32, 0
      %p97 = por %p95, %p96
      %s98 = ssub.s32 %s33, %s45
      %p99 = scmp.eq.s32.totalorder %s98, 0
      %s101 = sadd.s32 %s100, 1
      %s102 = scalar_select %p99, %s100, %s101
      %p105 = pneg %p99
      %p106 = scmp.eq.s32.totalorder %s26, 1
      %p107 = por %p105, %p106
      %p108 = scmp.ne.s32.totalorder %s100, %s103
      %p109 = scmp.eq.s32.totalorder %s26, 0
      %p110 = por %p108, %p109
      %p111 = scmp.ne.s32.totalorder %s100, %s103
      %p112 = scmp.eq.s32.totalorder %s31, 1
      %p113 = por %p111, %p112
      %p114 = scmp.ne.s32.totalorder %s103, %s104
      %p115 = scmp.eq.s32.totalorder %s31, 0
      %p116 = por %p114, %p115
      %p117 = scmp.ne.s32.totalorder %s103, %s104
      %p118 = scmp.eq.s32.totalorder %s32, 1
      %p119 = por %p117, %p118
      %p121 = scmp.ne.s32.totalorder %s104, %s120
      %p122 = scmp.eq.s32.totalorder %s32, 0
      %p123 = por %p121, %p122
      %s124 = ssub.s32 %s33, %s45
      %p125 = scmp.eq.s32.totalorder %s124, 0
      %s127 = sadd.s32 %s126, 1
      %s128 = scalar_select %p125, %s126, %s127
      %p131 = pneg %p125
      %p132 = scmp.eq.s32.totalorder %s26, 1
      %p133 = por %p131, %p132
      %p134 = scmp.ne.s32.totalorder %s126, %s129
      %p135 = scmp.eq.s32.totalorder %s26, 0
      %p136 = por %p134, %p135
      %p137 = scmp.ne.s32.totalorder %s126, %s129
      %p138 = scmp.eq.s32.totalorder %s31, 1
      %p139 = por %p137, %p138
      %p140 = scmp.ne.s32.totalorder %s129, %s130
      %p141 = scmp.eq.s32.totalorder %s31, 0
      %p142 = por %p140, %p141
      %p143 = scmp.ne.s32.totalorder %s129, %s130
      %p144 = scmp.eq.s32.totalorder %s32, 1
      %p145 = por %p143, %p144
      %p147 = scmp.ne.s32.totalorder %s130, %s146
      %p148 = scmp.eq.s32.totalorder %s32, 0
      %p149 = por %p147, %p148
      %s150 = ssub.s32 %s33, %s45
      %p151 = scmp.eq.s32.totalorder %s150, 0
      %s153 = sadd.s32 %s152, 1
      %s154 = scalar_select %p151, %s152, %s153
      %p157 = pneg %p151
      %p158 = scmp.eq.s32.totalorder %s26, 1
      %p159 = por %p157, %p158
      %p160 = scmp.ne.s32.totalorder %s152, %s155
      %p161 = scmp.eq.s32.totalorder %s26, 0
      %p162 = por %p160, %p161
      %p163 = scmp.ne.s32.totalorder %s152, %s155
      %p164 = scmp.eq.s32.totalorder %s31, 1
      %p165 = por %p163, %p164
      %p166 = scmp.ne.s32.totalorder %s155, %s156
      %p167 = scmp.eq.s32.totalorder %s31, 0
      %p168 = por %p166, %p167
      %p169 = scmp.ne.s32.totalorder %s155, %s156
      %p170 = scmp.eq.s32.totalorder %s32, 1
      %p171 = por %p169, %p170
      %p173 = scmp.ne.s32.totalorder %s156, %s172
      %p174 = scmp.eq.s32.totalorder %s32, 0
      %p175 = por %p173, %p174
      %s176 = ssub.s32 %s33, %s45
      %p177 = scmp.eq.s32.totalorder %s176, 0
      %s179 = sadd.s32 %s178, 1
      %s180 = scalar_select %p177, %s178, %s179
      %p183 = pneg %p177
      %p184 = scmp.eq.s32.totalorder %s26, 1
      %p185 = por %p183, %p184
      %p186 = scmp.ne.s32.totalorder %s178, %s181
      %p187 = scmp.eq.s32.totalorder %s26, 0
      %p188 = por %p186, %p187
      %p189 = scmp.ne.s32.totalorder %s178, %s181
      %p190 = scmp.eq.s32.totalorder %s31, 1
      %p191 = por %p189, %p190
      %p192 = scmp.ne.s32.totalorder %s181, %s182
      %p193 = scmp.eq.s32.totalorder %s31, 0
      %p194 = por %p192, %p193
      %p195 = scmp.ne.s32.totalorder %s181, %s182
      %p196 = scmp.eq.s32.totalorder %s32, 1
      %p197 = por %p195, %p196
      %p199 = scmp.ne.s32.totalorder %s182, %s198
      %p200 = scmp.eq.s32.totalorder %s32, 0
      %p201 = por %p199, %p200
      %s202 = ssub.s32 %s33, %s45
      %p203 = scmp.eq.s32.totalorder %s202, 0
      %s205 = sadd.s32 %s204, 1
      %s206 = scalar_select %p203, %s204, %s205
      %p209 = pneg %p203
      %p210 = scmp.eq.s32.totalorder %s26, 1
      %p211 = por %p209, %p210
      %p212 = scmp.ne.s32.totalorder %s204, %s207
      %p213 = scmp.eq.s32.totalorder %s26, 0
      %p214 = por %p212, %p213
      %p215 = scmp.ne.s32.totalorder %s204, %s207
      %p216 = scmp.eq.s32.totalorder %s31, 1
      %p217 = por %p215, %p216
      %p218 = scmp.ne.s32.totalorder %s207, %s208
      %p219 = scmp.eq.s32.totalorder %s31, 0
      %p220 = por %p218, %p219
      %p221 = scmp.ne.s32.totalorder %s207, %s208
      %p222 = scmp.eq.s32.totalorder %s32, 1
      %p223 = por %p221, %p222
      %p225 = scmp.ne.s32.totalorder %s208, %s224
      %p226 = scmp.eq.s32.totalorder %s32, 0
      %p227 = por %p225, %p226
      %s228 = ssub.s32 %s33, %s45
      %p229 = scmp.eq.s32.totalorder %s228, 0
      %s231 = sadd.s32 %s230, 1
      %s232 = scalar_select %p229, %s230, %s231
      %p235 = pneg %p229
      %p236 = scmp.eq.s32.totalorder %s26, 1
      %p237 = por %p235, %p236
      %p238 = scmp.ne.s32.totalorder %s230, %s233
      %p239 = scmp.eq.s32.totalorder %s26, 0
      %p240 = por %p238, %p239
      %p241 = scmp.ne.s32.totalorder %s230, %s233
      %p242 = scmp.eq.s32.totalorder %s31, 1
      %p243 = por %p241, %p242
      %p244 = scmp.ne.s32.totalorder %s233, %s234
      %p245 = scmp.eq.s32.totalorder %s31, 0
      %p246 = por %p244, %p245
      %p247 = scmp.ne.s32.totalorder %s233, %s234
      %p248 = scmp.eq.s32.totalorder %s32, 1
      %p249 = por %p247, %p248
      %p251 = scmp.ne.s32.totalorder %s234, %s250
      %p252 = scmp.eq.s32.totalorder %s32, 0
      %p253 = por %p251, %p252
      %s254 = ssub.s32 %s33, %s45
      %p255 = scmp.eq.s32.totalorder %s254, 0
      %s257 = sadd.s32 %s256, 1
      %s258 = scalar_select %p255, %s256, %s257
      %p261 = pneg %p255
      %p262 = scmp.eq.s32.totalorder %s26, 1
      %p263 = por %p261, %p262
      %p264 = scmp.ne.s32.totalorder %s256, %s259
      %p265 = scmp.eq.s32.totalorder %s26, 0
      %p266 = por %p264, %p265
      %p267 = scmp.ne.s32.totalorder %s256, %s259
      %p268 = scmp.eq.s32.totalorder %s31, 1
      %p269 = por %p267, %p268
      %p270 = scmp.ne.s32.totalorder %s259, %s260
      %p271 = scmp.eq.s32.totalorder %s31, 0
      %p272 = por %p270, %p271
      %p273 = scmp.ne.s32.totalorder %s259, %s260
      %p274 = scmp.eq.s32.totalorder %s32, 1
      %p275 = por %p273, %p274
      %p277 = scmp.ne.s32.totalorder %s260, %s276
      %p278 = scmp.eq.s32.totalorder %s32, 0
      %p279 = por %p277, %p278
      %s280 = ssub.s32 %s33, %s45
      %p281 = scmp.eq.s32.totalorder %s280, 0
      %s283 = sadd.s32 %s282, 1
      %s284 = scalar_select %p281, %s282, %s283
      %p287 = pneg %p281
      %p288 = scmp.eq.s32.totalorder %s26, 1
      %p289 = por %p287, %p288
      %p290 = scmp.ne.s32.totalorder %s282, %s285
      %p291 = scmp.eq.s32.totalorder %s26, 0
      %p292 = por %p290, %p291
      %p293 = scmp.ne.s32.totalorder %s282, %s285
      %p294 = scmp.eq.s32.totalorder %s31, 1
      %p295 = por %p293, %p294
      %p296 = scmp.ne.s32.totalorder %s285, %s286
      %p297 = scmp.eq.s32.totalorder %s31, 0
      %p298 = por %p296, %p297
      %p299 = scmp.ne.s32.totalorder %s285, %s286
      %p300 = scmp.eq.s32.totalorder %s32, 1
      %p301 = por %p299, %p300
      %p303 = scmp.ne.s32.totalorder %s286, %s302
      %p304 = scmp.eq.s32.totalorder %s32, 0
      %p305 = por %p303, %p304
      %s306 = ssub.s32 %s33, %s45
      %p307 = scmp.eq.s32.totalorder %s306, 0
      %s309 = sadd.s32 %s308, 1
      %s310 = scalar_select %p307, %s308, %s309
      %p313 = pneg %p307
      %p314 = scmp.eq.s32.totalorder %s26, 1
      %p315 = por %p313, %p314
      %p316 = scmp.ne.s32.totalorder %s308, %s311
      %p317 = scmp.eq.s32.totalorder %s26, 0
      %p318 = por %p316, %p317
      %p319 = scmp.ne.s32.totalorder %s308, %s311
      %p320 = scmp.eq.s32.totalorder %s31, 1
      %p321 = por %p319, %p320
      %p322 = scmp.ne.s32.totalorder %s311, %s312
      %p323 = scmp.eq.s32.totalorder %s31, 0
      %p324 = por %p322, %p323
      %p325 = scmp.ne.s32.totalorder %s311, %s312
      %p326 = scmp.eq.s32.totalorder %s32, 1
      %p327 = por %p325, %p326
      %p329 = scmp.ne.s32.totalorder %s312, %s328
      %p330 = scmp.eq.s32.totalorder %s32, 0
      %p331 = por %p329, %p330
      %s332 = ssub.s32 %s33, %s45
      %s333 = ssub.s32 %s34, %s41
      %s334 = sor.u32 %s332, %s333
      %p335 = scmp.eq.s32.totalorder %s334, 0
      %s337 = sadd.s32 %s336, 1
      %s338 = scalar_select %p335, %s336, %s337
      %p341 = pneg %p335
      %p342 = scmp.eq.s32.totalorder %s26, 1
      %p343 = por %p341, %p342
      %p344 = scmp.ne.s32.totalorder %s336, %s339
      %p345 = scmp.eq.s32.totalorder %s26, 0
      %p346 = por %p344, %p345
      %p347 = scmp.ne.s32.totalorder %s336, %s339
      %p348 = scmp.eq.s32.totalorder %s31, 1
      %p349 = por %p347, %p348
      %p350 = scmp.ne.s32.totalorder %s339, %s340
      %p351 = scmp.eq.s32.totalorder %s31, 0
      %p352 = por %p350, %p351
      %p353 = scmp.ne.s32.totalorder %s339, %s340
      %p354 = scmp.eq.s32.totalorder %s32, 1
      %p355 = por %p353, %p354
      %p357 = scmp.ne.s32.totalorder %s340, %s356
      %p358 = scmp.eq.s32.totalorder %s32, 0
      %p359 = por %p357, %p358
      %p360 = scmp.le.s32.totalorder 1, %s26
      %p361 = scmp.lt.s32.totalorder %s26, 3
      %p362 = pnand %p360, %p361
      %p363 = pneg %p362
      // Predicated region
      $region9: #{tpu_custom_call.1} parent=5 // pred_check
        _
      $region10: #{tpu_custom_call.1} parent=5 // pred_check_branch
        %365 = sbr.rel (%p362) target = $region12
      $region11: #{tpu_custom_call.1} parent=5 // pred_region
        %s366 = ssub.s32 %s26, 1
        // Predicated region
        $region13: #{tpu_custom_call.1} parent=11 // pred_check
          %p367 = pneg %p64
        $region14: #{tpu_custom_call.1} parent=11 // pred_check_branch
          %369 = sbr.rel (%p367) target = $region16
        $region15: #{tpu_custom_call.1} parent=11 // pred_region
          %p370 = scmp.lt.s32.totalorder %s36, 0
          %s371 = scalar_select %p370, %s36, 0
          %s372 = smul.addr %s371, 8
          %s373 = scalar_lea.vmem %s0, %s372
        $region16: #{tpu_custom_call.1} parent=11 // pred_fallthru
          _
      $region12: #{tpu_custom_call.1} parent=5 // pred_fallthru
        _
      %p374 = scmp.lt.s32.totalorder %s26, 2
      // Predicated region
      $region17: #{tpu_custom_call.1} parent=5 // pred_check
        %p375 = pneg %p374
      $region18: #{tpu_custom_call.1} parent=5 // pred_check_branch
        %377 = sbr.rel (%p375) target = $region20
      $region19: #{tpu_custom_call.1} parent=5 // pred_region
        // Predicated region
        $region21: #{tpu_custom_call.1} parent=19 // pred_check
          %p378 = pneg %p84
        $region22: #{tpu_custom_call.1} parent=19 // pred_check_branch
          %380 = sbr.rel (%p378) target = $region24
        $region23: #{tpu_custom_call.1} parent=19 // pred_region
          %p381 = scmp.lt.s32.totalorder %s33, 1
          %s382 = scalar_select %p381, %s33, 1
          %s383 = smul.addr %s382, 8
          %s384 = smul.addr %s383, 4
          %s385 = scalar_lea.vmem %s1, %s384
        $region24: #{tpu_custom_call.1} parent=19 // pred_fallthru
          _
        // Predicated region
        $region25: #{tpu_custom_call.1} parent=19 // pred_check
          %p386 = pneg %p110
        $region26: #{tpu_custom_call.1} parent=19 // pred_check_branch
          %388 = sbr.rel (%p386) target = $region28
        $region27: #{tpu_custom_call.1} parent=19 // pred_region
          %p389 = scmp.lt.s32.totalorder %s33, 1
          %s390 = scalar_select %p389, %s33, 1
          %s391 = smul.addr %s390, 2
          %s392 = scalar_lea.vmem %s2, %s391
        $region28: #{tpu_custom_call.1} parent=19 // pred_fallthru
          _
        // Predicated region
        $region29: #{tpu_custom_call.1} parent=19 // pred_check
          %p393 = pneg %p136
        $region30: #{tpu_custom_call.1} parent=19 // pred_check_branch
          %395 = sbr.rel (%p393) target = $region32
        $region31: #{tpu_custom_call.1} parent=19 // pred_region
          %s396 = sand.u32 %s126, 1
          %s397 = scalar_lea.sflag [#allocation3], %s396
          %s398 = sand.u32 %s126, 1
          %s399 = smul.addr %s398, 256
          %s400 = scalar_lea.vmem [#allocation2], %s399
          %s402 = ssub.s32 4096, 4096
          %403 = vsyncadd %s397, %s402
          %s404 = smul.addr %s33, 64
          %s405 = smul.addr %s404, 64
          %s406 = scalar_lea.hbm %s3, %s405
          %s407 = sshll.u32 %s400, 4
          %s408 = int_to_ptr.vmem [resolvable:$true] %s407
          %413 = dma.hbm_to_vmem [thread:$0]  %s406, 4096, %s408, %s397, 128, 128, 8
        $region32: #{tpu_custom_call.1} parent=19 // pred_fallthru
          _
        // Predicated region
        $region33: #{tpu_custom_call.1} parent=19 // pred_check
          %p414 = pneg %p162
        $region34: #{tpu_custom_call.1} parent=19 // pred_check_branch
          %416 = sbr.rel (%p414) target = $region36
        $region35: #{tpu_custom_call.1} parent=19 // pred_region
          %p417 = scmp.lt.s32.totalorder %s33, 1
          %s418 = scalar_select %p417, %s33, 1
          %s419 = smul.addr %s418, 2
          %s420 = scalar_lea.vmem %s4, %s419
        $region36: #{tpu_custom_call.1} parent=19 // pred_fallthru
          _
        // Predicated region
        $region37: #{tpu_custom_call.1} parent=19 // pred_check
          %p421 = pneg %p188
        $region38: #{tpu_custom_call.1} parent=19 // pred_check_branch
          %423 = sbr.rel (%p421) target = $region40
        $region39: #{tpu_custom_call.1} parent=19 // pred_region
          %s424 = sand.u32 %s178, 1
          %s425 = scalar_lea.sflag [#allocation6], %s424
          %s426 = sand.u32 %s178, 1
          %s427 = smul.addr %s426, 128
          %s428 = scalar_lea.vmem [#allocation5], %s427
          %s430 = ssub.s32 2048, 2048
          %431 = vsyncadd %s425, %s430
          %s432 = smul.addr %s33, 32
          %s433 = smul.addr %s432, 64
          %s434 = scalar_lea.hbm %s5, %s433
          %s435 = sshll.u32 %s428, 4
          %s436 = int_to_ptr.vmem [resolvable:$true] %s435
          %441 = dma.hbm_to_vmem [thread:$0]  %s434, 2048, %s436, %s425, 64, 64, 4
        $region40: #{tpu_custom_call.1} parent=19 // pred_fallthru
          _
        // Predicated region
        $region41: #{tpu_custom_call.1} parent=19 // pred_check
          %p442 = pneg %p214
        $region42: #{tpu_custom_call.1} parent=19 // pred_check_branch
          %444 = sbr.rel (%p442) target = $region44
        $region43: #{tpu_custom_call.1} parent=19 // pred_region
          %p445 = scmp.lt.s32.totalorder %s33, 1
          %s446 = scalar_select %p445, %s33, 1
          %s447 = scalar_lea.vmem %s6, %s446
        $region44: #{tpu_custom_call.1} parent=19 // pred_fallthru
          _
        // Predicated region
        $region45: #{tpu_custom_call.1} parent=19 // pred_check
          %p448 = pneg %p240
        $region46: #{tpu_custom_call.1} parent=19 // pred_check_branch
          %450 = sbr.rel (%p448) target = $region48
        $region47: #{tpu_custom_call.1} parent=19 // pred_region
          %p451 = scmp.lt.s32.totalorder %s33, 1
          %s452 = scalar_select %p451, %s33, 1
          %s453 = smul.addr %s452, 16
          %s454 = smul.addr %s453, 4
          %s455 = scalar_lea.vmem %s7, %s454
        $region48: #{tpu_custom_call.1} parent=19 // pred_fallthru
          _
        // Predicated region
        $region49: #{tpu_custom_call.1} parent=19 // pred_check
          %p456 = pneg %p266
        $region50: #{tpu_custom_call.1} parent=19 // pred_check_branch
          %458 = sbr.rel (%p456) target = $region52
        $region51: #{tpu_custom_call.1} parent=19 // pred_region
          %p459 = scmp.lt.s32.totalorder %s33, 1
          %s460 = scalar_select %p459, %s33, 1
          %s461 = scalar_lea.vmem %s8, %s460
        $region52: #{tpu_custom_call.1} parent=19 // pred_fallthru
          _
        // Predicated region
        $region53: #{tpu_custom_call.1} parent=19 // pred_check
          %p462 = pneg %p292
        $region54: #{tpu_custom_call.1} parent=19 // pred_check_branch
          %464 = sbr.rel (%p462) target = $region56
        $region55: #{tpu_custom_call.1} parent=19 // pred_region
          %p465 = scmp.lt.s32.totalorder %s33, 1
          %s466 = scalar_select %p465, %s33, 1
          %s467 = smul.addr %s466, 8
          %s468 = smul.addr %s467, 4
          %s469 = scalar_lea.vmem %s9, %s468
        $region56: #{tpu_custom_call.1} parent=19 // pred_fallthru
          _
        // Predicated region
        $region57: #{tpu_custom_call.1} parent=19 // pred_check
          %p470 = pneg %p318
        $region58: #{tpu_custom_call.1} parent=19 // pred_check_branch
          %472 = sbr.rel (%p470) target = $region60
        $region59: #{tpu_custom_call.1} parent=19 // pred_region
          %p473 = scmp.lt.s32.totalorder %s33, 1
          %s474 = scalar_select %p473, %s33, 1
          %s475 = scalar_lea.vmem %s10, %s474
        $region60: #{tpu_custom_call.1} parent=19 // pred_fallthru
          _
      $region20: #{tpu_custom_call.1} parent=5 // pred_fallthru
        _
      %p476 = scmp.le.s32.totalorder 1, %s26
      %p477 = scmp.lt.s32.totalorder %s26, 3
      %p478 = pnand %p476, %p477
      %p479 = pneg %p478
      // Predicated region
      $region61: #{tpu_custom_call.1} parent=5 // pred_check
        _
      $region62: #{tpu_custom_call.1} parent=5 // pred_check_branch
        %481 = sbr.rel (%p478) target = $region64
      $region63: #{tpu_custom_call.1} parent=5 // pred_region
        %s482 = ssub.s32 %s26, 1
        %s483 = sand.u32 %s129, 1
        %s484 = scalar_lea.sflag [#allocation3], %s483
        %s485 = sand.u32 %s129, 1
        %s486 = smul.addr %s485, 256
        %s487 = scalar_lea.vmem [#allocation2], %s486
        // Predicated region
        $region65: #{tpu_custom_call.1} parent=63 // pred_check
          %p488 = pneg %p142
        $region66: #{tpu_custom_call.1} parent=63 // pred_check_branch
          %490 = sbr.rel (%p488) target = $region68
        $region67: #{tpu_custom_call.1} parent=63 // pred_region
          %491 = dma.done %s484, 4096
        $region68: #{tpu_custom_call.1} parent=63 // pred_fallthru
          _
        %s492 = sand.u32 %s181, 1
        %s493 = scalar_lea.sflag [#allocation6], %s492
        %s494 = sand.u32 %s181, 1
        %s495 = smul.addr %s494, 128
        %s496 = scalar_lea.vmem [#allocation5], %s495
        // Predicated region
        $region69: #{tpu_custom_call.1} parent=63 // pred_check
          %p497 = pneg %p194
        $region70: #{tpu_custom_call.1} parent=63 // pred_check_branch
          %499 = sbr.rel (%p497) target = $region72
        $region71: #{tpu_custom_call.1} parent=63 // pred_region
          %500 = dma.done %s493, 2048
        $region72: #{tpu_custom_call.1} parent=63 // pred_fallthru
          _
        %p501 = scmp.lt.s32.totalorder %s36, 0
        %s502 = scalar_select %p501, %s36, 0
        %s503 = smul.addr %s502, 8
        %s504 = scalar_lea.vmem %s0, %s503
        %p505 = pneg %p64
        %p506 = pneg %p61
        %p507 = scmp.lt.s32.totalorder %s35, 1
        %s508 = scalar_select %p507, %s35, 1
        %s509 = smul.addr %s508, 8
        %s510 = smul.addr %s509, 4
        %s511 = scalar_lea.vmem %s1, %s510
        %p512 = pneg %p90
        %p513 = pneg %p87
        %p514 = scmp.lt.s32.totalorder %s35, 1
        %s515 = scalar_select %p514, %s35, 1
        %s516 = smul.addr %s515, 2
        %s517 = scalar_lea.vmem %s2, %s516
        %p518 = pneg %p116
        %p519 = pneg %p113
        %s520 = sand.u32 %s129, 1
        %s521 = scalar_lea.sflag [#allocation3], %s520
        %s522 = sand.u32 %s129, 1
        %s523 = smul.addr %s522, 256
        %s524 = scalar_lea.vmem [#allocation2], %s523
        %p525 = pneg %p142
        %p526 = pneg %p139
        %p527 = scmp.lt.s32.totalorder %s35, 1
        %s528 = scalar_select %p527, %s35, 1
        %s529 = smul.addr %s528, 2
        %s530 = scalar_lea.vmem %s4, %s529
        %p531 = pneg %p168
        %p532 = pneg %p165
        %s533 = sand.u32 %s181, 1
        %s534 = scalar_lea.sflag [#allocation6], %s533
        %s535 = sand.u32 %s181, 1
        %s536 = smul.addr %s535, 128
        %s537 = scalar_lea.vmem [#allocation5], %s536
        %p538 = pneg %p194
        %p539 = pneg %p191
        %p540 = scmp.lt.s32.totalorder %s35, 1
        %s541 = scalar_select %p540, %s35, 1
        %s542 = scalar_lea.vmem %s6, %s541
        %p543 = pneg %p220
        %p544 = pneg %p217
        %p545 = scmp.lt.s32.totalorder %s35, 1
        %s546 = scalar_select %p545, %s35, 1
        %s547 = smul.addr %s546, 16
        %s548 = smul.addr %s547, 4
        %s549 = scalar_lea.vmem %s7, %s548
        %p550 = pneg %p246
        %p551 = pneg %p243
        %p552 = scmp.lt.s32.totalorder %s35, 1
        %s553 = scalar_select %p552, %s35, 1
        %s554 = scalar_lea.vmem %s8, %s553
        %p555 = pneg %p272
        %p556 = pneg %p269
        %p557 = scmp.lt.s32.totalorder %s35, 1
        %s558 = scalar_select %p557, %s35, 1
        %s559 = smul.addr %s558, 8
        %s560 = smul.addr %s559, 4
        %s561 = scalar_lea.vmem %s9, %s560
        %p562 = pneg %p298
        %p563 = pneg %p295
        %p564 = scmp.lt.s32.totalorder %s35, 1
        %s565 = scalar_select %p564, %s35, 1
        %s566 = scalar_lea.vmem %s10, %s565
        %p567 = pneg %p324
        %p568 = pneg %p321
        %p569 = pneg %p352
        %p570 = pneg %p349
        %s571 = sand.u32 %s339, 1
        %s572 = scalar_lea.sflag [#allocation4], %s571
        %s573 = sand.u32 %s339, 1
        %s574 = smul.addr %s573, 8
        %s575 = scalar_lea.vmem [#allocation7], %s574
        %p576 = scmp.lt.s32.totalorder %s36, 0
        %s577 = scalar_select %p576, %s36, 0
        %s578 = smul.addr %s577, 8
        %s579 = scalar_lea.vmem %s0, %s578
        %p580 = scmp.lt.s32.totalorder %s35, 1
        %s581 = scalar_select %p580, %s35, 1
        %s582 = smul.addr %s581, 8
        %s583 = smul.addr %s582, 4
        %s584 = scalar_lea.vmem %s1, %s583
        %p585 = scmp.lt.s32.totalorder %s35, 1
        %s586 = scalar_select %p585, %s35, 1
        %s587 = smul.addr %s586, 2
        %s588 = scalar_lea.vmem %s2, %s587
        %p589 = scmp.lt.s32.totalorder %s35, 1
        %s590 = scalar_select %p589, %s35, 1
        %s591 = smul.addr %s590, 2
        %s592 = scalar_lea.vmem %s4, %s591
        %p593 = scmp.lt.s32.totalorder %s35, 1
        %s594 = scalar_select %p593, %s35, 1
        %s595 = scalar_lea.vmem %s6, %s594
        %p596 = scmp.lt.s32.totalorder %s35, 1
        %s597 = scalar_select %p596, %s35, 1
        %s598 = smul.addr %s597, 16
        %s599 = smul.addr %s598, 4
        %s600 = scalar_lea.vmem %s7, %s599
        %p601 = scmp.lt.s32.totalorder %s35, 1
        %s602 = scalar_select %p601, %s35, 1
        %s603 = scalar_lea.vmem %s8, %s602
        %p604 = scmp.lt.s32.totalorder %s35, 1
        %s605 = scalar_select %p604, %s35, 1
        %s606 = smul.addr %s605, 8
        %s607 = smul.addr %s606, 4
        %s608 = scalar_lea.vmem %s9, %s607
        %p609 = scmp.lt.s32.totalorder %s35, 1
        %s610 = scalar_select %p609, %s35, 1
        %s611 = scalar_lea.vmem %s10, %s610
        %v613 = vld [vmem:[%s579] sm:$0xff]
        %v614 = vpack.c.bf16 %v613, %v613
        %v615 = vld [vmem:[%s584] sm:$0xff]
        %v616 = vld [vmem:[%s584 + $0x8] sm:$0xff]
        %v617 = vld [vmem:[%s584 + $0x10] sm:$0xff]
        %v618 = vld [vmem:[%s584 + $0x18] sm:$0xff]
        %v619 = vld [vmem:[%s588] sm:$0x3]
        %v621 = vlaneseq
        %v622 = vshrl.u32 %v621, 7
        %v623 = vsub.s32 0, %v622
        %v624 = vrot.slane %v619, %v623
        %v625 = vlaneseq
        %v626 = vshrl.u32 %v625, 7
        %v627 = vsub.s32 1, %v626
        %v628 = vrot.slane %v619, %v627
        %v635 = vunpack.c.l.b16 %v615
        %v636 = vunpack.c.h.b16 %v615
        %v637 = vunpack.c.l.b16 %v616
        %v638 = vunpack.c.h.b16 %v616
        %v639 = vunpack.c.l.b16 %v617
        %v640 = vunpack.c.h.b16 %v617
        %v641 = vunpack.c.l.b16 %v618
        %v642 = vunpack.c.h.b16 %v618
        %v643 = vpack.c.b16 %v637, %v635
        %v644 = vpack.c.b16 %v638, %v636
        %v645 = vpack.c.b16 %v641, %v639
        %v646 = vpack.c.b16 %v642, %v640
        %vm651 = vcmask 261120
        %v653 = vsel %vm651, %v614, 0
        %655 = vmatprep.subr.bf16.mxu0 %v644
        %656 = vmatpush1.bf16.msra.mxu0 %v643
        %657 = vmatprep.subr.bf16.mxu0 %v646
        %658 = vmatpush1.bf16.msra.mxu0 %v645
        %659 = vmatprep.subr.bf16.mxu0 0
        %660 = vmatpush1.bf16.msra.mxu0 0
        %661 = vmatprep.subr.bf16.mxu0 0
        %662 = vmatpush1.bf16.msra.mxu0 0
        %663 = vmatprep.subr.bf16.mxu0 0
        %664 = vmatpush1.bf16.msra.mxu0 0
        %665 = vmatprep.subr.bf16.mxu0 0
        %666 = vmatpush1.bf16.msra.mxu0 0
        %667 = vmatprep.subr.bf16.mxu0 0
        %668 = vmatpush1.bf16.msra.mxu0 0
        %669 = vmatprep.subr.bf16.mxu0 0
        %670 = vmatpush1.bf16.msra.mxu0 0
        %671 = vmatprep.subr.bf16.mxu0 0
        %672 = vmatpush1.bf16.msra.mxu0 0
        %673 = vmatprep.subr.bf16.mxu0 0
        %674 = vmatpush1.bf16.msra.mxu0 0
        %675 = vmatprep.subr.bf16.mxu0 0
        %676 = vmatpush1.bf16.msra.mxu0 0
        %677 = vmatprep.subr.bf16.mxu0 0
        %678 = vmatpush1.bf16.msra.mxu0 0
        %679 = vmatprep.subr.bf16.mxu0 0
        %680 = vmatpush1.bf16.msra.mxu0 0
        %681 = vmatprep.subr.bf16.mxu0 0
        %682 = vmatpush1.bf16.msra.mxu0 0
        %683 = vmatprep.subr.bf16.mxu0 0
        %684 = vmatpush1.bf16.msra.mxu0 0
        %685 = vmatprep.subr.bf16.mxu0 0
        %686 = vmatpush1.bf16.msra.mxu0 0
        %687 = vmatprep.mubr.bf16.mxu0 0
        %688 = vmatmul.mubr.bf16.gmra.mrb[0].mxu0 %v653
        %v689 = vpop.f32.mrb[0].mxu0
        %v690 = vadd.f32 %v624, %v689
        %v691 = vpop.f32.mrb[0].mxu0
        %v692 = vadd.f32 %v628, %v691
        %v693 = vpop.f32.mrb[0].mxu0
        %v694 = vpop.f32.mrb[0].mxu0
        %695 = vdwg.mxu0
        %v696 = vmax.f32 %v690, 0.0
        %v697 = vmax.f32 %v692, 0.0
        %v698 = vpack.c.bf16 %v696, %v696
        %v699 = vpack.c.bf16 %v697, %v697
        %v700 = vld [vmem:[%s487] sm:$0xff]
        %v701 = vld [vmem:[%s487 + $0x8] sm:$0xff]
        %v702 = vld [vmem:[%s487 + $0x10] sm:$0xff]
        %v703 = vld [vmem:[%s487 + $0x18] sm:$0xff]
        %v704 = vld [vmem:[%s487 + $0x20] sm:$0xff]
        %v705 = vld [vmem:[%s487 + $0x28] sm:$0xff]
        %v706 = vld [vmem:[%s487 + $0x30] sm:$0xff]
        %v707 = vld [vmem:[%s487 + $0x38] sm:$0xff]
        %v708 = vld [vmem:[%s487 + $0x40] sm:$0xff]
        %v709 = vld [vmem:[%s487 + $0x48] sm:$0xff]
        %v710 = vld [vmem:[%s487 + $0x50] sm:$0xff]
        %v711 = vld [vmem:[%s487 + $0x58] sm:$0xff]
        %v712 = vld [vmem:[%s487 + $0x60] sm:$0xff]
        %v713 = vld [vmem:[%s487 + $0x68] sm:$0xff]
        %v714 = vld [vmem:[%s487 + $0x70] sm:$0xff]
        %v715 = vld [vmem:[%s487 + $0x78] sm:$0xff]
        %v716 = vld [vmem:[%s487 + $0x80] sm:$0xff]
        %v717 = vld [vmem:[%s487 + $0x88] sm:$0xff]
        %v718 = vld [vmem:[%s487 + $0x90] sm:$0xff]
        %v719 = vld [vmem:[%s487 + $0x98] sm:$0xff]
        %v720 = vld [vmem:[%s487 + $0xa0] sm:$0xff]
        %v721 = vld [vmem:[%s487 + $0xa8] sm:$0xff]
        %v722 = vld [vmem:[%s487 + $0xb0] sm:$0xff]
        %v723 = vld [vmem:[%s487 + $0xb8] sm:$0xff]
        %v724 = vld [vmem:[%s487 + $0xc0] sm:$0xff]
        %v725 = vld [vmem:[%s487 + $0xc8] sm:$0xff]
        %v726 = vld [vmem:[%s487 + $0xd0] sm:$0xff]
        %v727 = vld [vmem:[%s487 + $0xd8] sm:$0xff]
        %v728 = vld [vmem:[%s487 + $0xe0] sm:$0xff]
        %v729 = vld [vmem:[%s487 + $0xe8] sm:$0xff]
        %v730 = vld [vmem:[%s487 + $0xf0] sm:$0xff]
        %v731 = vld [vmem:[%s487 + $0xf8] sm:$0xff]
        %v732 = vld [vmem:[%s592] sm:$0x3]
        %v734 = vlaneseq
        %v735 = vshrl.u32 %v734, 7
        %v736 = vsub.s32 0, %v735
        %v737 = vrot.slane %v732, %v736
        %v738 = vlaneseq
        %v739 = vshrl.u32 %v738, 7
        %v740 = vsub.s32 1, %v739
        %v741 = vrot.slane %v732, %v740
        %v776 = vunpack.c.l.b16 %v700
        %v777 = vunpack.c.h.b16 %v700
        %v778 = vunpack.c.l.b16 %v701
        %v779 = vunpack.c.h.b16 %v701
        %v780 = vunpack.c.l.b16 %v702
        %v781 = vunpack.c.h.b16 %v702
        %v782 = vunpack.c.l.b16 %v703
        %v783 = vunpack.c.h.b16 %v703
        %v784 = vunpack.c.l.b16 %v704
        %v785 = vunpack.c.h.b16 %v704
        %v786 = vunpack.c.l.b16 %v705
        %v787 = vunpack.c.h.b16 %v705
        %v788 = vunpack.c.l.b16 %v706
        %v789 = vunpack.c.h.b16 %v706
        %v790 = vunpack.c.l.b16 %v707
        %v791 = vunpack.c.h.b16 %v707
        %v792 = vunpack.c.l.b16 %v708
        %v793 = vunpack.c.h.b16 %v708
        %v794 = vunpack.c.l.b16 %v709
        %v795 = vunpack.c.h.b16 %v709
        %v796 = vunpack.c.l.b16 %v710
        %v797 = vunpack.c.h.b16 %v710
        %v798 = vunpack.c.l.b16 %v711
        %v799 = vunpack.c.h.b16 %v711
        %v800 = vunpack.c.l.b16 %v712
        %v801 = vunpack.c.h.b16 %v712
        %v802 = vunpack.c.l.b16 %v713
        %v803 = vunpack.c.h.b16 %v713
        %v804 = vunpack.c.l.b16 %v714
        %v805 = vunpack.c.h.b16 %v714
        %v806 = vunpack.c.l.b16 %v715
        %v807 = vunpack.c.h.b16 %v715
        %v808 = vunpack.c.l.b16 %v716
        %v809 = vunpack.c.h.b16 %v716
        %v810 = vunpack.c.l.b16 %v717
        %v811 = vunpack.c.h.b16 %v717
        %v812 = vunpack.c.l.b16 %v718
        %v813 = vunpack.c.h.b16 %v718
        %v814 = vunpack.c.l.b16 %v719
        %v815 = vunpack.c.h.b16 %v719
        %v816 = vunpack.c.l.b16 %v720
        %v817 = vunpack.c.h.b16 %v720
        %v818 = vunpack.c.l.b16 %v721
        %v819 = vunpack.c.h.b16 %v721
        %v820 = vunpack.c.l.b16 %v722
        %v821 = vunpack.c.h.b16 %v722
        %v822 = vunpack.c.l.b16 %v723
        %v823 = vunpack.c.h.b16 %v723
        %v824 = vunpack.c.l.b16 %v724
        %v825 = vunpack.c.h.b16 %v724
        %v826 = vunpack.c.l.b16 %v725
        %v827 = vunpack.c.h.b16 %v725
        %v828 = vunpack.c.l.b16 %v726
        %v829 = vunpack.c.h.b16 %v726
        %v830 = vunpack.c.l.b16 %v727
        %v831 = vunpack.c.h.b16 %v727
        %v832 = vunpack.c.l.b16 %v728
        %v833 = vunpack.c.h.b16 %v728
        %v834 = vunpack.c.l.b16 %v729
        %v835 = vunpack.c.h.b16 %v729
        %v836 = vunpack.c.l.b16 %v730
        %v837 = vunpack.c.h.b16 %v730
        %v838 = vunpack.c.l.b16 %v731
        %v839 = vunpack.c.h.b16 %v731
        %v840 = vpack.c.b16 %v778, %v776
        %v841 = vpack.c.b16 %v779, %v777
        %v842 = vpack.c.b16 %v782, %v780
        %v843 = vpack.c.b16 %v783, %v781
        %v844 = vpack.c.b16 %v786, %v784
        %v845 = vpack.c.b16 %v787, %v785
        %v846 = vpack.c.b16 %v790, %v788
        %v847 = vpack.c.b16 %v791, %v789
        %v848 = vpack.c.b16 %v794, %v792
        %v849 = vpack.c.b16 %v795, %v793
        %v850 = vpack.c.b16 %v798, %v796
        %v851 = vpack.c.b16 %v799, %v797
        %v852 = vpack.c.b16 %v802, %v800
        %v853 = vpack.c.b16 %v803, %v801
        %v854 = vpack.c.b16 %v806, %v804
        %v855 = vpack.c.b16 %v807, %v805
        %v856 = vpack.c.b16 %v810, %v808
        %v857 = vpack.c.b16 %v811, %v809
        %v858 = vpack.c.b16 %v814, %v812
        %v859 = vpack.c.b16 %v815, %v813
        %v860 = vpack.c.b16 %v818, %v816
        %v861 = vpack.c.b16 %v819, %v817
        %v862 = vpack.c.b16 %v822, %v820
        %v863 = vpack.c.b16 %v823, %v821
        %v864 = vpack.c.b16 %v826, %v824
        %v865 = vpack.c.b16 %v827, %v825
        %v866 = vpack.c.b16 %v830, %v828
        %v867 = vpack.c.b16 %v831, %v829
        %v868 = vpack.c.b16 %v834, %v832
        %v869 = vpack.c.b16 %v835, %v833
        %v870 = vpack.c.b16 %v838, %v836
        %v871 = vpack.c.b16 %v839, %v837
        %904 = vmatprep.subr.bf16.mxu0 %v841
        %905 = vmatpush1.bf16.msra.mxu0 %v840
        %906 = vmatprep.subr.bf16.mxu0 %v843
        %907 = vmatpush1.bf16.msra.mxu0 %v842
        %908 = vmatprep.subr.bf16.mxu0 %v845
        %909 = vmatpush1.bf16.msra.mxu0 %v844
        %910 = vmatprep.subr.bf16.mxu0 %v847
        %911 = vmatpush1.bf16.msra.mxu0 %v846
        %912 = vmatprep.subr.bf16.mxu0 %v849
        %913 = vmatpush1.bf16.msra.mxu0 %v848
        %914 = vmatprep.subr.bf16.mxu0 %v851
        %915 = vmatpush1.bf16.msra.mxu0 %v850
        %916 = vmatprep.subr.bf16.mxu0 %v853
        %917 = vmatpush1.bf16.msra.mxu0 %v852
        %918 = vmatprep.subr.bf16.mxu0 %v855
        %919 = vmatpush1.bf16.msra.mxu0 %v854
        %920 = vmatprep.subr.bf16.mxu0 %v857
        %921 = vmatpush1.bf16.msra.mxu0 %v856
        %922 = vmatprep.subr.bf16.mxu0 %v859
        %923 = vmatpush1.bf16.msra.mxu0 %v858
        %924 = vmatprep.subr.bf16.mxu0 %v861
        %925 = vmatpush1.bf16.msra.mxu0 %v860
        %926 = vmatprep.subr.bf16.mxu0 %v863
        %927 = vmatpush1.bf16.msra.mxu0 %v862
        %928 = vmatprep.subr.bf16.mxu0 %v865
        %929 = vmatpush1.bf16.msra.mxu0 %v864
        %930 = vmatprep.subr.bf16.mxu0 %v867
        %931 = vmatpush1.bf16.msra.mxu0 %v866
        %932 = vmatprep.subr.bf16.mxu0 %v869
        %933 = vmatpush1.bf16.msra.mxu0 %v868
        %934 = vmatprep.subr.bf16.mxu0 %v871
        %935 = vmatpush1.bf16.msra.mxu0 %v870
        %936 = vmatprep.mubr.bf16.mxu0 %v699
        %937 = vmatmul.mubr.bf16.gmra.mrb[0].mxu0 %v698
        %v938 = vpop.f32.mrb[0].mxu0
        %v939 = vadd.f32 %v737, %v938
        %v940 = vpop.f32.mrb[0].mxu0
        %v941 = vadd.f32 %v741, %v940
        %v942 = vpop.f32.mrb[0].mxu0
        %v943 = vpop.f32.mrb[0].mxu0
        %944 = vdwg.mxu0
        %v945 = vmax.f32 %v939, 0.0
        %v946 = vmax.f32 %v941, 0.0
        %v947 = vpack.c.bf16 %v945, %v945
        %v948 = vpack.c.bf16 %v946, %v946
        %v949 = vld [vmem:[%s496] sm:$0xf]
        %v950 = vld [vmem:[%s496 + $0x4] sm:$0xf]
        %v951 = vld [vmem:[%s496 + $0x8] sm:$0xf]
        %v952 = vld [vmem:[%s496 + $0xc] sm:$0xf]
        %v953 = vld [vmem:[%s496 + $0x10] sm:$0xf]
        %v954 = vld [vmem:[%s496 + $0x14] sm:$0xf]
        %v955 = vld [vmem:[%s496 + $0x18] sm:$0xf]
        %v956 = vld [vmem:[%s496 + $0x1c] sm:$0xf]
        %v957 = vld [vmem:[%s496 + $0x20] sm:$0xf]
        %v958 = vld [vmem:[%s496 + $0x24] sm:$0xf]
        %v959 = vld [vmem:[%s496 + $0x28] sm:$0xf]
        %v960 = vld [vmem:[%s496 + $0x2c] sm:$0xf]
        %v961 = vld [vmem:[%s496 + $0x30] sm:$0xf]
        %v962 = vld [vmem:[%s496 + $0x34] sm:$0xf]
        %v963 = vld [vmem:[%s496 + $0x38] sm:$0xf]
        %v964 = vld [vmem:[%s496 + $0x3c] sm:$0xf]
        %v965 = vld [vmem:[%s496 + $0x40] sm:$0xf]
        %v966 = vld [vmem:[%s496 + $0x44] sm:$0xf]
        %v967 = vld [vmem:[%s496 + $0x48] sm:$0xf]
        %v968 = vld [vmem:[%s496 + $0x4c] sm:$0xf]
        %v969 = vld [vmem:[%s496 + $0x50] sm:$0xf]
        %v970 = vld [vmem:[%s496 + $0x54] sm:$0xf]
        %v971 = vld [vmem:[%s496 + $0x58] sm:$0xf]
        %v972 = vld [vmem:[%s496 + $0x5c] sm:$0xf]
        %v973 = vld [vmem:[%s496 + $0x60] sm:$0xf]
        %v974 = vld [vmem:[%s496 + $0x64] sm:$0xf]
        %v975 = vld [vmem:[%s496 + $0x68] sm:$0xf]
        %v976 = vld [vmem:[%s496 + $0x6c] sm:$0xf]
        %v977 = vld [vmem:[%s496 + $0x70] sm:$0xf]
        %v978 = vld [vmem:[%s496 + $0x74] sm:$0xf]
        %v979 = vld [vmem:[%s496 + $0x78] sm:$0xf]
        %v980 = vld [vmem:[%s496 + $0x7c] sm:$0xf]
        %v981 = vld [vmem:[%s595] sm:$0x1]
        %v983 = vlaneseq
        %v984 = vshrl.u32 %v983, 7
        %v985 = vsub.s32 0, %v984
        %v986 = vrot.slane %v981, %v985
        %v1020 = vunpack.c.l.b16 %v949
        %v1021 = vunpack.c.l.b16 %v950
        %v1022 = vunpack.c.l.b16 %v951
        %v1023 = vunpack.c.l.b16 %v952
        %v1024 = vunpack.c.l.b16 %v953
        %v1025 = vunpack.c.l.b16 %v954
        %v1026 = vunpack.c.l.b16 %v955
        %v1027 = vunpack.c.l.b16 %v956
        %v1028 = vunpack.c.l.b16 %v957
        %v1029 = vunpack.c.l.b16 %v958
        %v1030 = vunpack.c.l.b16 %v959
        %v1031 = vunpack.c.l.b16 %v960
        %v1032 = vunpack.c.l.b16 %v961
        %v1033 = vunpack.c.l.b16 %v962
        %v1034 = vunpack.c.l.b16 %v963
        %v1035 = vunpack.c.l.b16 %v964
        %v1036 = vunpack.c.l.b16 %v965
        %v1037 = vunpack.c.l.b16 %v966
        %v1038 = vunpack.c.l.b16 %v967
        %v1039 = vunpack.c.l.b16 %v968
        %v1040 = vunpack.c.l.b16 %v969
        %v1041 = vunpack.c.l.b16 %v970
        %v1042 = vunpack.c.l.b16 %v971
        %v1043 = vunpack.c.l.b16 %v972
        %v1044 = vunpack.c.l.b16 %v973
        %v1045 = vunpack.c.l.b16 %v974
        %v1046 = vunpack.c.l.b16 %v975
        %v1047 = vunpack.c.l.b16 %v976
        %v1048 = vunpack.c.l.b16 %v977
        %v1049 = vunpack.c.l.b16 %v978
        %v1050 = vunpack.c.l.b16 %v979
        %v1051 = vunpack.c.l.b16 %v980
        %v1052 = vpack.c.b16 %v1021, %v1020
        %v1053 = vpack.c.b16 %v1023, %v1022
        %v1054 = vpack.c.b16 %v1025, %v1024
        %v1055 = vpack.c.b16 %v1027, %v1026
        %v1056 = vpack.c.b16 %v1029, %v1028
        %v1057 = vpack.c.b16 %v1031, %v1030
        %v1058 = vpack.c.b16 %v1033, %v1032
        %v1059 = vpack.c.b16 %v1035, %v1034
        %v1060 = vpack.c.b16 %v1037, %v1036
        %v1061 = vpack.c.b16 %v1039, %v1038
        %v1062 = vpack.c.b16 %v1041, %v1040
        %v1063 = vpack.c.b16 %v1043, %v1042
        %v1064 = vpack.c.b16 %v1045, %v1044
        %v1065 = vpack.c.b16 %v1047, %v1046
        %v1066 = vpack.c.b16 %v1049, %v1048
        %v1067 = vpack.c.b16 %v1051, %v1050
        %1084 = vmatprep.subr.bf16.mxu0 0
        %1085 = vmatpush1.bf16.msra.mxu0 %v1052
        %1086 = vmatprep.subr.bf16.mxu0 0
        %1087 = vmatpush1.bf16.msra.mxu0 %v1053
        %1088 = vmatprep.subr.bf16.mxu0 0
        %1089 = vmatpush1.bf16.msra.mxu0 %v1054
        %1090 = vmatprep.subr.bf16.mxu0 0
        %1091 = vmatpush1.bf16.msra.mxu0 %v1055
        %1092 = vmatprep.subr.bf16.mxu0 0
        %1093 = vmatpush1.bf16.msra.mxu0 %v1056
        %1094 = vmatprep.subr.bf16.mxu0 0
        %1095 = vmatpush1.bf16.msra.mxu0 %v1057
        %1096 = vmatprep.subr.bf16.mxu0 0
        %1097 = vmatpush1.bf16.msra.mxu0 %v1058
        %1098 = vmatprep.subr.bf16.mxu0 0
        %1099 = vmatpush1.bf16.msra.mxu0 %v1059
        %1100 = vmatprep.subr.bf16.mxu0 0
        %1101 = vmatpush1.bf16.msra.mxu0 %v1060
        %1102 = vmatprep.subr.bf16.mxu0 0
        %1103 = vmatpush1.bf16.msra.mxu0 %v1061
        %1104 = vmatprep.subr.bf16.mxu0 0
        %1105 = vmatpush1.bf16.msra.mxu0 %v1062
        %1106 = vmatprep.subr.bf16.mxu0 0
        %1107 = vmatpush1.bf16.msra.mxu0 %v1063
        %1108 = vmatprep.subr.bf16.mxu0 0
        %1109 = vmatpush1.bf16.msra.mxu0 %v1064
        %1110 = vmatprep.subr.bf16.mxu0 0
        %1111 = vmatpush1.bf16.msra.mxu0 %v1065
        %1112 = vmatprep.subr.bf16.mxu0 0
        %1113 = vmatpush1.bf16.msra.mxu0 %v1066
        %1114 = vmatprep.subr.bf16.mxu0 0
        %1115 = vmatpush1.bf16.msra.mxu0 %v1067
        %1116 = vmatprep.mubr.bf16.mxu0 %v948
        %1117 = vmatmul.mubr.bf16.gmra.mrb[0].mxu0 %v947
        %v1118 = vpop.f32.mrb[0].mxu0
        %v1119 = vadd.f32 %v986, %v1118
        %v1120 = vpop.f32.mrb[0].mxu0
        %v1121 = vpop.f32.mrb[0].mxu0
        %v1122 = vpop.f32.mrb[0].mxu0
        %1123 = vdwg.mxu0
        %v1124 = vmax.f32 %v1119, 0.0
        %v1125 = vpack.c.bf16 %v1124, %v1124
        %v1126 = vld [vmem:[%s600] sm:$0xf]
        %v1127 = vld [vmem:[%s600 + $0x4] sm:$0xf]
        %v1128 = vld [vmem:[%s600 + $0x8] sm:$0xf]
        %v1129 = vld [vmem:[%s600 + $0xc] sm:$0xf]
        %v1130 = vld [vmem:[%s600 + $0x10] sm:$0xf]
        %v1131 = vld [vmem:[%s600 + $0x14] sm:$0xf]
        %v1132 = vld [vmem:[%s600 + $0x18] sm:$0xf]
        %v1133 = vld [vmem:[%s600 + $0x1c] sm:$0xf]
        %v1134 = vld [vmem:[%s600 + $0x20] sm:$0xf]
        %v1135 = vld [vmem:[%s600 + $0x24] sm:$0xf]
        %v1136 = vld [vmem:[%s600 + $0x28] sm:$0xf]
        %v1137 = vld [vmem:[%s600 + $0x2c] sm:$0xf]
        %v1138 = vld [vmem:[%s600 + $0x30] sm:$0xf]
        %v1139 = vld [vmem:[%s600 + $0x34] sm:$0xf]
        %v1140 = vld [vmem:[%s600 + $0x38] sm:$0xf]
        %v1141 = vld [vmem:[%s600 + $0x3c] sm:$0xf]
        %v1142 = vld [vmem:[%s603] sm:$0x1]
        %v1144 = vlaneseq
        %v1145 = vshrl.u32 %v1144, 7
        %v1146 = vsub.s32 0, %v1145
        %v1147 = vrot.slane %v1142, %v1146
        %v1165 = vunpack.c.l.b16 %v1126
        %v1166 = vunpack.c.l.b16 %v1127
        %v1167 = vunpack.c.l.b16 %v1128
        %v1168 = vunpack.c.l.b16 %v1129
        %v1169 = vunpack.c.l.b16 %v1130
        %v1170 = vunpack.c.l.b16 %v1131
        %v1171 = vunpack.c.l.b16 %v1132
        %v1172 = vunpack.c.l.b16 %v1133
        %v1173 = vunpack.c.l.b16 %v1134
        %v1174 = vunpack.c.l.b16 %v1135
        %v1175 = vunpack.c.l.b16 %v1136
        %v1176 = vunpack.c.l.b16 %v1137
        %v1177 = vunpack.c.l.b16 %v1138
        %v1178 = vunpack.c.l.b16 %v1139
        %v1179 = vunpack.c.l.b16 %v1140
        %v1180 = vunpack.c.l.b16 %v1141
        %v1181 = vpack.c.b16 %v1166, %v1165
        %v1182 = vpack.c.b16 %v1168, %v1167
        %v1183 = vpack.c.b16 %v1170, %v1169
        %v1184 = vpack.c.b16 %v1172, %v1171
        %v1185 = vpack.c.b16 %v1174, %v1173
        %v1186 = vpack.c.b16 %v1176, %v1175
        %v1187 = vpack.c.b16 %v1178, %v1177
        %v1188 = vpack.c.b16 %v1180, %v1179
        %1197 = vmatprep.subr.bf16.mxu0 0
        %1198 = vmatpush1.bf16.msra.mxu0 %v1181
        %1199 = vmatprep.subr.bf16.mxu0 0
        %1200 = vmatpush1.bf16.msra.mxu0 %v1182
        %1201 = vmatprep.subr.bf16.mxu0 0
        %1202 = vmatpush1.bf16.msra.mxu0 %v1183
        %1203 = vmatprep.subr.bf16.mxu0 0
        %1204 = vmatpush1.bf16.msra.mxu0 %v1184
        %1205 = vmatprep.subr.bf16.mxu0 0
        %1206 = vmatpush1.bf16.msra.mxu0 %v1185
        %1207 = vmatprep.subr.bf16.mxu0 0
        %1208 = vmatpush1.bf16.msra.mxu0 %v1186
        %1209 = vmatprep.subr.bf16.mxu0 0
        %1210 = vmatpush1.bf16.msra.mxu0 %v1187
        %1211 = vmatprep.subr.bf16.mxu0 0
        %1212 = vmatpush1.bf16.msra.mxu0 %v1188
        %1213 = vmatprep.subr.bf16.mxu0 0
        %1214 = vmatpush1.bf16.msra.mxu0 0
        %1215 = vmatprep.subr.bf16.mxu0 0
        %1216 = vmatpush1.bf16.msra.mxu0 0
        %1217 = vmatprep.subr.bf16.mxu0 0
        %1218 = vmatpush1.bf16.msra.mxu0 0
        %1219 = vmatprep.subr.bf16.mxu0 0
        %1220 = vmatpush1.bf16.msra.mxu0 0
        %1221 = vmatprep.subr.bf16.mxu0 0
        %1222 = vmatpush1.bf16.msra.mxu0 0
        %1223 = vmatprep.subr.bf16.mxu0 0
        %1224 = vmatpush1.bf16.msra.mxu0 0
        %1225 = vmatprep.subr.bf16.mxu0 0
        %1226 = vmatpush1.bf16.msra.mxu0 0
        %1227 = vmatprep.subr.bf16.mxu0 0
        %1228 = vmatpush1.bf16.msra.mxu0 0
        %1229 = vmatprep.mubr.bf16.mxu0 0
        %1230 = vmatmul.mubr.bf16.gmra.mrb[0].mxu0 %v1125
        %v1231 = vpop.f32.mrb[0].mxu0
        %v1232 = vadd.f32 %v1147, %v1231
        %v1233 = vpop.f32.mrb[0].mxu0
        %v1234 = vpop.f32.mrb[0].mxu0
        %v1235 = vpop.f32.mrb[0].mxu0
        %1236 = vdwg.mxu0
        %v1237 = vmax.f32 %v1232, 0.0
        %v1238 = vpack.c.bf16 %v1237, %v1237
        %v1239 = vld [vmem:[%s608] sm:$0xf]
        %v1240 = vld [vmem:[%s608 + $0x4] sm:$0xf]
        %v1241 = vld [vmem:[%s608 + $0x8] sm:$0xf]
        %v1242 = vld [vmem:[%s608 + $0xc] sm:$0xf]
        %v1243 = vld [vmem:[%s608 + $0x10] sm:$0xf]
        %v1244 = vld [vmem:[%s608 + $0x14] sm:$0xf]
        %v1245 = vld [vmem:[%s608 + $0x18] sm:$0xf]
        %v1246 = vld [vmem:[%s608 + $0x1c] sm:$0xf]
        %v1247 = vld [vmem:[%s611] sm:$0x1]
        %v1249 = vlaneseq
        %v1250 = vshrl.u32 %v1249, 7
        %v1251 = vsub.s32 0, %v1250
        %v1252 = vrot.slane %v1247, %v1251
        %v1262 = vunpack.c.l.b16 %v1239
        %v1263 = vunpack.c.l.b16 %v1240
        %v1264 = vunpack.c.l.b16 %v1241
        %v1265 = vunpack.c.l.b16 %v1242
        %v1266 = vunpack.c.l.b16 %v1243
        %v1267 = vunpack.c.l.b16 %v1244
        %v1268 = vunpack.c.l.b16 %v1245
        %v1269 = vunpack.c.l.b16 %v1246
        %v1270 = vpack.c.b16 %v1263, %v1262
        %v1271 = vpack.c.b16 %v1265, %v1264
        %v1272 = vpack.c.b16 %v1267, %v1266
        %v1273 = vpack.c.b16 %v1269, %v1268
        %vm1278 = vcmask 523264
        %v1280 = vsel %vm1278, %v1238, 0
        %1282 = vmatprep.subr.bf16.mxu0 0
        %1283 = vmatpush1.bf16.msra.mxu0 %v1270
        %1284 = vmatprep.subr.bf16.mxu0 0
        %1285 = vmatpush1.bf16.msra.mxu0 %v1271
        %1286 = vmatprep.subr.bf16.mxu0 0
        %1287 = vmatpush1.bf16.msra.mxu0 %v1272
        %1288 = vmatprep.subr.bf16.mxu0 0
        %1289 = vmatpush1.bf16.msra.mxu0 %v1273
        %1290 = vmatprep.subr.bf16.mxu0 0
        %1291 = vmatpush1.bf16.msra.mxu0 0
        %1292 = vmatprep.subr.bf16.mxu0 0
        %1293 = vmatpush1.bf16.msra.mxu0 0
        %1294 = vmatprep.subr.bf16.mxu0 0
        %1295 = vmatpush1.bf16.msra.mxu0 0
        %1296 = vmatprep.subr.bf16.mxu0 0
        %1297 = vmatpush1.bf16.msra.mxu0 0
        %1298 = vmatprep.subr.bf16.mxu0 0
        %1299 = vmatpush1.bf16.msra.mxu0 0
        %1300 = vmatprep.subr.bf16.mxu0 0
        %1301 = vmatpush1.bf16.msra.mxu0 0
        %1302 = vmatprep.subr.bf16.mxu0 0
        %1303 = vmatpush1.bf16.msra.mxu0 0
        %1304 = vmatprep.subr.bf16.mxu0 0
        %1305 = vmatpush1.bf16.msra.mxu0 0
        %1306 = vmatprep.subr.bf16.mxu0 0
        %1307 = vmatpush1.bf16.msra.mxu0 0
        %1308 = vmatprep.subr.bf16.mxu0 0
        %1309 = vmatpush1.bf16.msra.mxu0 0
        %1310 = vmatprep.subr.bf16.mxu0 0
        %1311 = vmatpush1.bf16.msra.mxu0 0
        %1312 = vmatprep.subr.bf16.mxu0 0
        %1313 = vmatpush1.bf16.msra.mxu0 0
        %1314 = vmatprep.mubr.bf16.mxu0 0
        %1315 = vmatmul.mubr.bf16.gmra.mrb[0].mxu0 %v1280
        %v1316 = vpop.f32.mrb[0].mxu0
        %v1317 = vadd.f32 %v1252, %v1316
        %v1318 = vpop.f32.mrb[0].mxu0
        %v1319 = vpop.f32.mrb[0].mxu0
        %v1320 = vpop.f32.mrb[0].mxu0
        %1321 = vdwg.mxu0
        %v1322 = vtanh.pop %v1317
        %1323 = vst [vmem:[%s575] sm:$0xff] %v1322
        %s1324 = sand.u32 %s339, 1
        %s1325 = scalar_lea.sflag [#allocation4], %s1324
        %s1326 = sand.u32 %s339, 1
        %s1327 = smul.addr %s1326, 8
        %s1328 = scalar_lea.vmem [#allocation7], %s1327
        // Predicated region
        $region73: #{tpu_custom_call.1} parent=63 // pred_check
          %p1329 = pneg %p349
        $region74: #{tpu_custom_call.1} parent=63 // pred_check_branch
          %1331 = sbr.rel (%p1329) target = $region76
        $region75: #{tpu_custom_call.1} parent=63 // pred_region
          %s1333 = ssub.s32 128, 128
          %1334 = vsyncadd %s1325, %s1333
          %s1335 = sadd.s32 %s36, %s35
          %s1336 = smul.addr %s1335, 128
          %s1337 = scalar_lea.hbm %s11, %s1336
          %s1339 = sshll.u32 %s1328, 4
          %s1340 = int_to_ptr.vmem [resolvable:$true] %s1339
          %1342 = dma.vmem_to_hbm [thread:$0]  %s1340, 128, %s1337, %s1325
        $region76: #{tpu_custom_call.1} parent=63 // pred_fallthru
          _
      $region64: #{tpu_custom_call.1} parent=5 // pred_fallthru
        _
      %p1343 = scmp.le.s32.totalorder 2, %s26
      // Predicated region
      $region77: #{tpu_custom_call.1} parent=5 // pred_check
        %p1344 = pneg %p1343
      $region78: #{tpu_custom_call.1} parent=5 // pred_check_branch
        %1346 = sbr.rel (%p1344) target = $region80
      $region79: #{tpu_custom_call.1} parent=5 // pred_region
        %s1347 = ssub.s32 %s26, 2
        // Predicated region
        $region81: #{tpu_custom_call.1} parent=79 // pred_check
          %p1348 = pneg %p355
        $region82: #{tpu_custom_call.1} parent=79 // pred_check_branch
          %1350 = sbr.rel (%p1348) target = $region84
        $region83: #{tpu_custom_call.1} parent=79 // pred_region
          %s1351 = sand.u32 %s340, 1
          %s1352 = scalar_lea.sflag [#allocation4], %s1351
          %s1353 = sand.u32 %s340, 1
          %s1354 = smul.addr %s1353, 8
          %s1355 = scalar_lea.vmem [#allocation7], %s1354
          %1356 = dma.done %s1352, 128
        $region84: #{tpu_custom_call.1} parent=79 // pred_fallthru
          _
      $region80: #{tpu_custom_call.1} parent=5 // pred_fallthru
        _
    $region6: #{tpu_custom_call.1} parent=1 // loop_footer
      %s30 = sadd.s32 1, %s26
    $region7: #{tpu_custom_call.1} parent=1 // loop_footer_branch
      %25 = sbr.rel target = $region3
    $region8: #{tpu_custom_call.1} parent=1 // loop_exit
      _
    %1357 = vsyncpa [#allocation3], 1
    %s1358 = scalar_lea.sflag [#allocation3], 1
    %1359 = vsyncpa %s1358, 1
    %1360 = vsyncpa [#allocation6], 1
    %s1361 = scalar_lea.sflag [#allocation6], 1
    %1362 = vsyncpa %s1361, 1
    %1363 = vsyncpa [#allocation4], 1
    %s1364 = scalar_lea.sflag [#allocation4], 1
    %1365 = vsyncpa %s1364, 1

</llo_original>
